<compile_context>
chip_gen: v5e
topology: v5e:2x2
jax: 0.10.0
libtpu: 0.0.40
codegen_flags: <defaults>
</compile_context>

<pallas_src>
import jax
import jax.numpy as jnp
from jax.experimental import pallas as pl
from jax.experimental.pallas import tpu as pltpu


def _make_layernorm_kernel(eps, n):
    """n = true number of elements per sample (zero padding excluded via n)."""
    denom = float(max(n - 1, 1))        # unbiased variance (torch .std default)
    inv_n = 1.0 / float(n)

    def kernel(x_ref, gb_ref, o_ref):
        # ---- fused per-sample statistics (single read of x) ----------------
        # Zero-padded lanes contribute 0 to both sums; n / denom use the true
        # element count, so padding never biases the moments.
        x = x_ref[...].astype(jnp.float32)                  # (Bblk, R, L)
        s = jnp.sum(x, axis=(1, 2), keepdims=True)          # (Bblk, 1, 1)
        ss = jnp.sum(x * x, axis=(1, 2), keepdims=True)     # (Bblk, 1, 1)
        mean = s * inv_n
        # Compensated single-pass variance: (ss - s*s/n) / (n-1), clamped >= 0.
        var = (ss - s * s * inv_n) * (1.0 / denom)
        std = jnp.sqrt(jnp.maximum(var, 0.0))
        inv = 1.0 / (std + eps)                             # (Bblk, 1, 1)

        # ---- per-row scale/shift (gamma/beta packed as one (R, 2) array) ---
        gamma = gb_ref[:, 0:1].astype(jnp.float32)          # (R, 1)
        beta = gb_ref[:, 1:2].astype(jnp.float32)           # (R, 1)
        scale = gamma[None, :, :] * inv                     # (Bblk, R, 1)
        shift = beta[None, :, :] - mean * scale             # (Bblk, R, 1)

        # ---- normalize + affine: exactly 1 mul + 1 add per element ---------
        # Re-read x_ref (instead of reusing the bound f32 `x`) so the compiler
        # need not keep a full-block f32 temp live for sub-32-bit inputs; the
        # extra VMEM load is hidden in spare vld slots (kernel is HBM-bound).
        y = x_ref[...].astype(jnp.float32) * scale + shift
        o_ref[...] = y.astype(o_ref.dtype)

    return kernel


def _round_up(v, m):
    return (v + m - 1) // m * m


def _pick_row_layout(C, HW):
    """Pick padded lane extent Lp (multiple of 128) and row width L | Lp."""
    Lp = _round_up(HW, 128)
    cands = [d for d in range(128, Lp + 1, 128) if Lp % d == 0]
    # Prefer layouts where R = C*Lp/L is a multiple of 8 (full sublane use),
    # then the largest L (smallest R -> smallest padded gamma/beta footprint).
    L = max(cands, key=lambda l: (((C * Lp // l) % 8) == 0, l))
    return L, Lp


def _pick_batch_block(B, per_sample_bytes, target_bytes=2 << 20):
    """Largest divisor of B with block <= target; keep >=2 grid steps (v7x)."""
    best = 1
    for d in range(1, B + 1):
        if B % d:
            continue
        if d * per_sample_bytes > target_bytes:
            continue
        if B >= 2 and (B // d) < 2:
            continue  # leave both v7x TensorCores work on the "parallel" axis
        best = max(best, d)
    return best


def layer_norm(x, gamma, beta, eps=1e-5, affine=True):
    """x: (B, C, H, W) NCHW. gamma, beta: (C,). Matches the PyTorch module."""
    B, C, H, W = x.shape
    HW = H * W
    n = C * HW                                   # true per-sample element count

    if not affine:
        gamma = jnp.ones((C,), dtype=jnp.float32)
        beta = jnp.zeros((C,), dtype=jnp.float32)

    # --- lane/sublane-dense layout ------------------------------------------
    L, Lp = _pick_row_layout(C, HW)
    R = C * Lp // L                              # rows per sample
    rows_per_chan = Lp // L

    x3 = x.reshape(B, C, HW)
    if Lp != HW:
        # Zero-pad the ragged lane dim; zeros are neutral for sum / sum-sq.
        x3 = jnp.pad(x3, ((0, 0), (0, 0), (0, Lp - HW)))
    x3 = x3.reshape(B, R, L)

    g_rows = jnp.repeat(gamma.astype(jnp.float32), rows_per_chan)
    b_rows = jnp.repeat(beta.astype(jnp.float32), rows_per_chan)
    gb = jnp.stack([g_rows, b_rows], axis=1)     # (R, 2) packed scale/shift src

    # --- batch multiple samples per grid step --------------------------------
    itemsize = jnp.dtype(x.dtype).itemsize
    per_sample_bytes = R * L * itemsize
    Bblk = _pick_batch_block(B, per_sample_bytes)
    grid = (B // Bblk,)

    kernel = _make_layernorm_kernel(eps, n)

    # --- honest, generation-aware VMEM budget --------------------------------
    block_bytes = Bblk * R * L * itemsize        # one in (or out) buffer
    f32_tmp_bytes = 2 * Bblk * R * L * 4         # x cast + y before final cast
    gb_pad_bytes = _round_up(R, 8) * 128 * 4     # (R,2) pads to (R_pad,128)
    vmem_needed = (2 * block_bytes              # double-buffered input
                   + 2 * block_bytes            # double-buffered output
                   + f32_tmp_bytes
                   + 2 * gb_pad_bytes
                   + (2 << 20))                  # headroom
    try:
        chip_vmem = pltpu.get_tpu_info().vmem_capacity_bytes
    except Exception:
        chip_vmem = 64 << 20                     # v7x worst case per TensorCore
    vmem_cap = chip_vmem - (8 << 20)

    cp_kwargs = dict(dimension_semantics=("parallel",))
    if vmem_needed > (16 << 20):                 # 16 MiB = v5e default scoped limit
        cp_kwargs["vmem_limit_bytes"] = int(min(vmem_needed, vmem_cap))
        # TODO(synk): if a single sample (Bblk == 1) still exceeds vmem_cap,
        # switch to a two-pass row-chunked pipeline (pass 1 accumulates
        # sum/sum-sq per chunk into scratch, pass 2 normalizes per chunk)
        # instead of relying on the capped whole-sample block.

    out = pl.pallas_call(
        kernel,
        out_shape=jax.ShapeDtypeStruct((B, R, L), x.dtype),
        grid_spec=pltpu.PrefetchScalarGridSpec(
            num_scalar_prefetch=0,
            grid=grid,
            in_specs=[
                pl.BlockSpec((Bblk, R, L), lambda b: (b, 0, 0)),
                pl.BlockSpec((R, 2), lambda b: (0, 0)),
            ],
            out_specs=pl.BlockSpec((Bblk, R, L), lambda b: (b, 0, 0)),
        ),
        compiler_params=pltpu.CompilerParams(**cp_kwargs),
    )(x3, gb)

    out = out.reshape(B, C, Lp)
    if Lp != HW:
        out = out[:, :, :HW]
    return out.reshape(B, C, H, W)


if __name__ == "__main__":
    key = jax.random.PRNGKey(0)
    kx, kg = jax.random.split(key)

    B, C, H, W = 2, 4, 16, 16
    x = jax.random.normal(kx, (B, C, H, W), dtype=jnp.float32)

    # Deterministic parameter init matching the PyTorch module:
    # gamma ~ U[0,1), beta = 0
    gamma = jax.random.uniform(kg, (C,), dtype=jnp.float32)
    beta = jnp.zeros((C,), dtype=jnp.float32)

    y = layer_norm(x, gamma, beta, eps=1e-5, affine=True)
    jax.block_until_ready(y)

    # Pure-JAX reference of the same math (per-sample mean, unbiased std,
    # divide by (std + eps), per-channel affine).
    xf = x.reshape(B, -1).astype(jnp.float32)
    mean = xf.mean(axis=1).reshape(B, 1, 1, 1)
    std = jnp.sqrt(
        jnp.sum((xf - xf.mean(axis=1, keepdims=True)) ** 2, axis=1)
        / (xf.shape[1] - 1)
    ).reshape(B, 1, 1, 1)
    ref = (x - mean) / (std + 1e-5)
    ref = ref * gamma.reshape(1, C, 1, 1) + beta.reshape(1, C, 1, 1)
    assert jnp.allclose(y, ref, atol=1e-4, rtol=1e-4)

    print("KERNEL_OK")
</pallas_src>

<mosaic_0001>
module attributes {stable_mosaic.version = 11 : i64} {
  func.func @kernel(%arg0: i32, %arg1: memref<1x8x128xf32, #tpu.memory_space<vmem>>, %arg2: memref<8x2xf32, #tpu.memory_space<vmem>>, %arg3: memref<1x8x128xf32, #tpu.memory_space<vmem>>) attributes {dimension_semantics = [#tpu.dimension_semantics<parallel>], iteration_bounds = array<i64: 2>, scalar_prefetch = 0 : i64, scratch_operands = 0 : i64, tpu.core_type = #tpu.core_type<tc>, window_params = [{transform_indices = @transform_0, window_bounds = array<i64: 1, 8, 128>}, {pipeline_mode = #tpu.pipeline_mode<synchronous>, transform_indices = @transform_1, window_bounds = array<i64: 8, 2>}, {transform_indices = @transform_2, window_bounds = array<i64: 1, 8, 128>}]} {
    %c0 = arith.constant 0 : index
    %c0_0 = arith.constant 0 : index
    %c0_1 = arith.constant 0 : index
    %0 = vector.load %arg1[%c0, %c0_0, %c0_1] : memref<1x8x128xf32, #tpu.memory_space<vmem>>, vector<1x8x128xf32>
    %cst = arith.constant dense<0.000000e+00> : vector<1xf32>
    %1 = vector.multi_reduction <add>, %0, %cst [1, 2] : vector<1x8x128xf32> to vector<1xf32>
    %2 = vector.shape_cast %1 : vector<1xf32> to vector<1x1x1xf32>
    %3 = arith.mulf %0, %0 : vector<1x8x128xf32>
    %cst_2 = arith.constant dense<0.000000e+00> : vector<1xf32>
    %4 = vector.multi_reduction <add>, %3, %cst_2 [1, 2] : vector<1x8x128xf32> to vector<1xf32>
    %5 = vector.shape_cast %4 : vector<1xf32> to vector<1x1x1xf32>
    %cst_3 = arith.constant 9.765625E-4 : f32
    %6 = vector.broadcast %cst_3 : f32 to vector<1x1x1xf32>
    %7 = arith.mulf %2, %6 : vector<1x1x1xf32>
    %8 = arith.mulf %2, %2 : vector<1x1x1xf32>
    %cst_4 = arith.constant 9.765625E-4 : f32
    %9 = vector.broadcast %cst_4 : f32 to vector<1x1x1xf32>
    %10 = arith.mulf %8, %9 : vector<1x1x1xf32>
    %11 = arith.subf %5, %10 : vector<1x1x1xf32>
    %cst_5 = arith.constant 9.77517105E-4 : f32
    %12 = vector.broadcast %cst_5 : f32 to vector<1x1x1xf32>
    %13 = arith.mulf %11, %12 : vector<1x1x1xf32>
    %cst_6 = arith.constant 0.000000e+00 : f32
    %14 = vector.broadcast %cst_6 : f32 to vector<1x1x1xf32>
    %15 = arith.maximumf %13, %14 : vector<1x1x1xf32>
    %16 = math.sqrt %15 : vector<1x1x1xf32>
    %cst_7 = arith.constant 9.99999974E-6 : f32
    %17 = vector.broadcast %cst_7 : f32 to vector<1x1x1xf32>
    %18 = arith.addf %16, %17 : vector<1x1x1xf32>
    %cst_8 = arith.constant 1.000000e+00 : f32
    %19 = vector.broadcast %cst_8 : f32 to vector<1x1x1xf32>
    %20 = arith.divf %19, %18 : vector<1x1x1xf32>
    %c0_9 = arith.constant 0 : index
    %c0_10 = arith.constant 0 : index
    %21 = vector.load %arg2[%c0_9, %c0_10] : memref<8x2xf32, #tpu.memory_space<vmem>>, vector<8x1xf32>
    %c0_11 = arith.constant 0 : index
    %c1 = arith.constant 1 : index
    %22 = vector.load %arg2[%c0_11, %c1] : memref<8x2xf32, #tpu.memory_space<vmem>>, vector<8x1xf32>
    %23 = vector.shape_cast %21 : vector<8x1xf32> to vector<1x8x1xf32>
    %24 = vector.broadcast %20 : vector<1x1x1xf32> to vector<1x8x1xf32>
    %25 = arith.mulf %23, %24 : vector<1x8x1xf32>
    %26 = vector.shape_cast %22 : vector<8x1xf32> to vector<1x8x1xf32>
    %27 = vector.broadcast %7 : vector<1x1x1xf32> to vector<1x8x1xf32>
    %28 = arith.mulf %27, %25 : vector<1x8x1xf32>
    %29 = arith.subf %26, %28 : vector<1x8x1xf32>
    %c0_12 = arith.constant 0 : index
    %c0_13 = arith.constant 0 : index
    %c0_14 = arith.constant 0 : index
    %30 = vector.load %arg1[%c0_12, %c0_13, %c0_14] : memref<1x8x128xf32, #tpu.memory_space<vmem>>, vector<1x8x128xf32>
    %31 = vector.broadcast %25 : vector<1x8x1xf32> to vector<1x8x128xf32>
    %32 = arith.mulf %30, %31 : vector<1x8x128xf32>
    %33 = vector.broadcast %29 : vector<1x8x1xf32> to vector<1x8x128xf32>
    %34 = arith.addf %32, %33 : vector<1x8x128xf32>
    %c0_15 = arith.constant 0 : index
    %c0_16 = arith.constant 0 : index
    %c0_17 = arith.constant 0 : index
    %35 = vector.load %arg3[%c0_15, %c0_16, %c0_17] : memref<1x8x128xf32, #tpu.memory_space<vmem>>, vector<1x8x128xf32>
    tpu.vector_store %arg3[%c0_15, %c0_16, %c0_17], %34 {strides = array<i32>} : memref<1x8x128xf32, #tpu.memory_space<vmem>>, vector<1x8x128xf32>,
    return
  }
  func.func @transform_0(%arg0: i32) -> (i32, i32, i32) {
    %c0_i32 = arith.constant 0 : i32
    %c0_i32_0 = arith.constant 0 : i32
    %c0_i32_1 = arith.constant 0 : i32
    return %arg0, %c0_i32, %c0_i32_0 : i32, i32, i32
  }
  func.func @transform_1(%arg0: i32) -> (i32, i32) {
    %c0_i32 = arith.constant 0 : i32
    %c0_i32_0 = arith.constant 0 : i32
    %c0_i32_1 = arith.constant 0 : i32
    return %c0_i32, %c0_i32_0 : i32, i32
  }
  func.func @transform_2(%arg0: i32) -> (i32, i32, i32) {
    %c0_i32 = arith.constant 0 : i32
    %c0_i32_0 = arith.constant 0 : i32
    %c0_i32_1 = arith.constant 0 : i32
    return %arg0, %c0_i32, %c0_i32_0 : i32, i32, i32
  }
}

</mosaic_0001>

<llo_original>
// kernel: tpu_custom_call.1
$region0: #{tpu_custom_call.1}
  #allocation0 [shape = 'u32[]', space=smem, size = 0x4, offset = 0x4, fixed_abs, tag = 'smem constant byte address 0x4 - core index']
  #allocation1 [shape = 'u32[72,128]{1,0:T(1,128)}', space=vmem, size = 0x9000, scoped, tag = 'internal scratch']
  %s0 = inlined_call_operand.hbm [shape: f32[2,8,128], index: 0, kind: input, shape index: {}]
  %s1 = inlined_call_operand.vmem [shape: f32[8,2], index: 1, kind: input, shape index: {}]
  %s2 = inlined_call_operand.hbm [shape: f32[2,8,128], index: 2, kind: output, shape index: {}]
  %s3 = sld [smem:[#allocation0]]
  $region45: #{tpu_custom_call.1} parent=0
    _
  %s5 = ssub.s32 1, %s3
  %s6 = scalar_select 0, %s5, %s3
  $region1: #{tpu_custom_call.1} parent=0
    #allocation2 [shape = 'u8[8192]{0}', space=vmem, size = 0x2000, scoped, tag = 'input window, operand 0']
    #allocation3 [shape = 's32[2]{0}', space=sflag, size = 0x8, scoped, tag = 'scoped memory for tpu_custom_call.1']
    #allocation4 [shape = 's32[2]{0}', space=sflag, size = 0x8, scoped, tag = 'scoped memory for tpu_custom_call.1']
    #allocation5 [shape = 'u8[8192]{0}', space=vmem, size = 0x2000, scoped, tag = 'output window, operand 0']
    %7 = vsyncpa [#allocation3], 0
    %s8 = scalar_lea.sflag [#allocation3], 1
    %9 = vsyncpa %s8, 0
    %10 = vsyncpa [#allocation4], 0
    %s11 = scalar_lea.sflag [#allocation4], 1
    %12 = vsyncpa %s11, 0
    loop: start=0, step=1, limit=4
    $region2: #{tpu_custom_call.1} parent=1 // loop_pre_header
      _
    $region3: #{tpu_custom_call.1} parent=1 // loop_header
      %s14 = sphi 0, %s18
      %p15 = scmp.ge.s32.totalorder %s14, 4
      %s24 = sphi 0, %s26
      %s27 = sphi 0, %s24
      %s28 = sphi 0, %s27
      %s44 = sphi 0, %s28
      %s48 = sphi 0, %s48
      %s50 = sphi 0, %s48
      %s51 = sphi 0, %s50
      %s65 = sphi 0, %s51
      %s71 = sphi 0, %s73
      %s74 = sphi 0, %s71
      %s75 = sphi 0, %s74
      %s91 = sphi 0, %s75
    $region4: #{tpu_custom_call.1} parent=1 // loop_header_branch
      %17 = sbr.rel (%p15) target = $region8
    $region5: #{tpu_custom_call.1} parent=1 // loop_body
      %s19 = ssub.s32 %s14, 1
      %s20 = ssub.s32 %s14, 2
      %s21 = sadd.s32 %s14, 1
      %s22 = ssub.s32 %s14, %s21
      %p23 = scmp.eq.s32.totalorder %s22, 0
      %s25 = sadd.s32 %s24, 1
      %s26 = scalar_select %p23, %s24, %s25
      %p29 = pneg %p23
      %p30 = scmp.eq.s32.totalorder %s14, 1
      %p31 = por %p29, %p30
      %p32 = scmp.ne.s32.totalorder %s24, %s27
      %p33 = scmp.eq.s32.totalorder %s14, 0
      %p34 = por %p32, %p33
      %p35 = scmp.ne.s32.totalorder %s24, %s27
      %p36 = scmp.eq.s32.totalorder %s19, 1
      %p37 = por %p35, %p36
      %p38 = scmp.ne.s32.totalorder %s27, %s28
      %p39 = scmp.eq.s32.totalorder %s19, 0
      %p40 = por %p38, %p39
      %p41 = scmp.ne.s32.totalorder %s27, %s28
      %p42 = scmp.eq.s32.totalorder %s20, 1
      %p43 = por %p41, %p42
      %p45 = scmp.ne.s32.totalorder %s28, %s44
      %p46 = scmp.eq.s32.totalorder %s20, 0
      %p47 = por %p45, %p46
      %s49 = sadd.s32 %s48, 1
      %p52 = scmp.eq.s32.totalorder %s14, 1
      %p53 = scmp.ne.s32.totalorder %s48, %s50
      %p54 = scmp.eq.s32.totalorder %s14, 0
      %p55 = por %p53, %p54
      %p56 = scmp.ne.s32.totalorder %s48, %s50
      %p57 = scmp.eq.s32.totalorder %s19, 1
      %p58 = por %p56, %p57
      %p59 = scmp.ne.s32.totalorder %s50, %s51
      %p60 = scmp.eq.s32.totalorder %s19, 0
      %p61 = por %p59, %p60
      %p62 = scmp.ne.s32.totalorder %s50, %s51
      %p63 = scmp.eq.s32.totalorder %s20, 1
      %p64 = por %p62, %p63
      %p66 = scmp.ne.s32.totalorder %s51, %s65
      %p67 = scmp.eq.s32.totalorder %s20, 0
      %p68 = por %p66, %p67
      %s69 = ssub.s32 %s14, %s21
      %p70 = scmp.eq.s32.totalorder %s69, 0
      %s72 = sadd.s32 %s71, 1
      %s73 = scalar_select %p70, %s71, %s72
      %p76 = pneg %p70
      %p77 = scmp.eq.s32.totalorder %s14, 1
      %p78 = por %p76, %p77
      %p79 = scmp.ne.s32.totalorder %s71, %s74
      %p80 = scmp.eq.s32.totalorder %s14, 0
      %p81 = por %p79, %p80
      %p82 = scmp.ne.s32.totalorder %s71, %s74
      %p83 = scmp.eq.s32.totalorder %s19, 1
      %p84 = por %p82, %p83
      %p85 = scmp.ne.s32.totalorder %s74, %s75
      %p86 = scmp.eq.s32.totalorder %s19, 0
      %p87 = por %p85, %p86
      %p88 = scmp.ne.s32.totalorder %s74, %s75
      %p89 = scmp.eq.s32.totalorder %s20, 1
      %p90 = por %p88, %p89
      %p92 = scmp.ne.s32.totalorder %s75, %s91
      %p93 = scmp.eq.s32.totalorder %s20, 0
      %p94 = por %p92, %p93
      %p95 = scmp.le.s32.totalorder 1, %s14
      %p96 = scmp.lt.s32.totalorder %s14, 3
      %p97 = pnand %p95, %p96
      %p98 = pneg %p97
      // Predicated region
      $region9: #{tpu_custom_call.1} parent=5 // pred_check
        _
      $region10: #{tpu_custom_call.1} parent=5 // pred_check_branch
        %100 = sbr.rel (%p97) target = $region12
      $region11: #{tpu_custom_call.1} parent=5 // pred_region
        %s101 = ssub.s32 %s14, 1
        // Predicated region
        $region13: #{tpu_custom_call.1} parent=11 // pred_check
          %p102 = pneg %p61
        $region14: #{tpu_custom_call.1} parent=11 // pred_check_branch
          %104 = sbr.rel (%p102) target = $region16
        $region15: #{tpu_custom_call.1} parent=11 // pred_region
          _
        $region16: #{tpu_custom_call.1} parent=11 // pred_fallthru
          _
      $region12: #{tpu_custom_call.1} parent=5 // pred_fallthru
        _
      %p105 = scmp.lt.s32.totalorder %s14, 2
      // Predicated region
      $region17: #{tpu_custom_call.1} parent=5 // pred_check
        %p106 = pneg %p105
      $region18: #{tpu_custom_call.1} parent=5 // pred_check_branch
        %108 = sbr.rel (%p106) target = $region20
      $region19: #{tpu_custom_call.1} parent=5 // pred_region
        // Predicated region
        $region21: #{tpu_custom_call.1} parent=19 // pred_check
          %p109 = pneg %p34
        $region22: #{tpu_custom_call.1} parent=19 // pred_check_branch
          %111 = sbr.rel (%p109) target = $region24
        $region23: #{tpu_custom_call.1} parent=19 // pred_region
          %s112 = sand.u32 %s24, 1
          %s113 = scalar_lea.sflag [#allocation3], %s112
          %s114 = sand.u32 %s24, 1
          %s115 = smul.addr %s114, 8
          %s116 = scalar_lea.vmem [#allocation2], %s115
          %118 = vsyncadd %s113, 0
          %s119 = smul.addr %s14, 8
          %s120 = scalar_lea.hbm %s0, %s119
          %s122 = sshll.u32 %s120, 4
          %s123 = int_to_ptr.hbm [resolvable:$true] %s122
          %s124 = sshll.u32 %s116, 4
          %s125 = int_to_ptr.vmem [resolvable:$true] %s124
          %127 = dma.hbm_to_vmem [thread:$0]  %s123, 128, %s125, %s113
        $region24: #{tpu_custom_call.1} parent=19 // pred_fallthru
          _
      $region20: #{tpu_custom_call.1} parent=5 // pred_fallthru
        _
      %p128 = scmp.le.s32.totalorder 1, %s14
      %p129 = scmp.lt.s32.totalorder %s14, 3
      %p130 = pnand %p128, %p129
      %p131 = pneg %p130
      // Predicated region
      $region25: #{tpu_custom_call.1} parent=5 // pred_check
        _
      $region26: #{tpu_custom_call.1} parent=5 // pred_check_branch
        %133 = sbr.rel (%p130) target = $region28
      $region27: #{tpu_custom_call.1} parent=5 // pred_region
        %s134 = ssub.s32 %s14, 1
        %s135 = sand.u32 %s27, 1
        %s136 = scalar_lea.sflag [#allocation3], %s135
        %s137 = sand.u32 %s27, 1
        %s138 = smul.addr %s137, 8
        %s139 = scalar_lea.vmem [#allocation2], %s138
        // Predicated region
        $region29: #{tpu_custom_call.1} parent=27 // pred_check
          %p140 = pneg %p40
        $region30: #{tpu_custom_call.1} parent=27 // pred_check_branch
          %142 = sbr.rel (%p140) target = $region32
        $region31: #{tpu_custom_call.1} parent=27 // pred_region
          %144 = dma.done %s136, 128
        $region32: #{tpu_custom_call.1} parent=27 // pred_fallthru
          _
        %s145 = sand.u32 %s27, 1
        %s146 = scalar_lea.sflag [#allocation3], %s145
        %s147 = sand.u32 %s27, 1
        %s148 = smul.addr %s147, 8
        %s149 = scalar_lea.vmem [#allocation2], %s148
        %p150 = pneg %p40
        %p151 = pneg %p37
        %p152 = pneg %p61
        %p153 = pneg %p58
        %p154 = pneg %p87
        %p155 = pneg %p84
        %s156 = sand.u32 %s74, 1
        %s157 = scalar_lea.sflag [#allocation4], %s156
        %s158 = sand.u32 %s74, 1
        %s159 = smul.addr %s158, 8
        %s160 = scalar_lea.vmem [#allocation5], %s159
        %v161 = vld [vmem:[%s139] sm:$0xff]
        %162 = vadd.xlane.f32.xlu0 %v161
        %v163 = vpop.xlane.xlu0 %162
        %v164 = vrot.slane %v163, 4
        %v165 = vadd.f32 %v163, %v164
        %v166 = vrot.slane %v165, 2
        %v167 = vadd.f32 %v165, %v166
        %v168 = vrot.slane %v167, 1
        %v169 = vadd.f32 %v167, %v168
        %v170 = vmul.f32 %v161, %v161
        %171 = vadd.xlane.f32.xlu0 %v170
        %v172 = vpop.xlane.xlu0 %171
        %v173 = vrot.slane %v172, 4
        %v174 = vadd.f32 %v172, %v173
        %v175 = vrot.slane %v174, 2
        %v176 = vadd.f32 %v174, %v175
        %v177 = vrot.slane %v176, 1
        %v178 = vadd.f32 %v176, %v177
        %v179 = vmul.f32 %v169, 0.0009765625
        %v180 = vmul.f32 %v169, %v169
        %v181 = vmul.f32 %v180, 0.0009765625
        %v182 = vsub.f32 %v178, %v181
        %v183 = vmul.f32 %v182, 0.0009775171
        %v184 = vmax.f32 %v183, 0.0
        %v185 = vrsqrt.pop %v184
        %v186 = vmul.f32 %v185, %v184
        %v187 = vmul.f32 %v186, %v185
        %v188 = vmul.f32 0.5, %v187
        %v189 = vsub.f32 1.5, %v188
        %v190 = vmul.f32 %v185, %v189
        %v191 = vmul.f32 %v184, %v190
        %vm192 = vcmp.eq.f32.partialorder %v184, inf
        %v193 = vsel %vm192, %v184, %v191
        %vm194 = vcmp.eq.f32.partialorder %v184, 0.0
        %v195 = vand.u32 %v184, 2147483648
        %v196 = vsel %vm194, %v195, %v193
        %v197 = vadd.f32 %v196, 1e-05
        %v198 = vrcp.pop %v197
        %v199 = vmul.f32 %v197, %v198
        %v200 = vsub.f32 1.0, %v199
        %v201 = vmul.f32 %v198, %v200
        %v202 = vadd.f32 %v198, %v201
        %vm203 = vweird.f32 %v197
        %vm204 = vweird.f32 %v198
        %vm205 = vmor %vm203, %vm204
        %v206 = vsel %vm205, %v198, %v202
        %v207 = vand.u32 2147483647, %v197
        %vm208 = vcmp.eq.f32.partialorder %v207, 8.507059e+37
        %v209 = vand.u32 %v197, 2147483648
        %v210 = vor.u32 1.1754944e-38, %v209
        %v211 = vsel %vm208, %v210, %v206
        %v212 = vmul.f32 1.0, %v211
        %v213 = vld [vmem:[%s1] sm:$0xff]
        %v214 = vmul.f32 %v213, %v212
        %v215 = vmul.f32 %v179, %v214
        %217 = vrot.lane.b32.xlu0 %v215, 1
        %v218 = vpop.permute.xlu0 %217
        %v220 = vsub.f32 %v213, %v218
        %222 = vset.pattern.permute.xlu0 0
        %223 = vperm.xlu0 %222, %v214
        %v224 = vpop.permute.xlu0 %223
        %v226 = vmul.f32 %v161, %v224
        %228 = vset.pattern.permute.xlu0 1
        %229 = vperm.xlu0 %228, %v220
        %v230 = vpop.permute.xlu0 %229
        %v232 = vadd.f32 %v226, %v230
        %233 = vst [vmem:[%s160] sm:$0xff] %v232
        %s234 = sand.u32 %s74, 1
        %s235 = scalar_lea.sflag [#allocation4], %s234
        %s236 = sand.u32 %s74, 1
        %s237 = smul.addr %s236, 8
        %s238 = scalar_lea.vmem [#allocation5], %s237
        // Predicated region
        $region33: #{tpu_custom_call.1} parent=27 // pred_check
          %p239 = pneg %p84
        $region34: #{tpu_custom_call.1} parent=27 // pred_check_branch
          %241 = sbr.rel (%p239) target = $region36
        $region35: #{tpu_custom_call.1} parent=27 // pred_region
          %243 = vsyncadd %s235, 0
          %s244 = smul.addr %s19, 8
          %s245 = scalar_lea.hbm %s2, %s244
          %s247 = sshll.u32 %s238, 4
          %s248 = int_to_ptr.vmem [resolvable:$true] %s247
          %s249 = sshll.u32 %s245, 4
          %s250 = int_to_ptr.hbm [resolvable:$true] %s249
          %252 = dma.vmem_to_hbm [thread:$0]  %s248, 128, %s250, %s235
        $region36: #{tpu_custom_call.1} parent=27 // pred_fallthru
          _
      $region28: #{tpu_custom_call.1} parent=5 // pred_fallthru
        _
      %p253 = scmp.le.s32.totalorder 2, %s14
      // Predicated region
      $region37: #{tpu_custom_call.1} parent=5 // pred_check
        %p254 = pneg %p253
      $region38: #{tpu_custom_call.1} parent=5 // pred_check_branch
        %256 = sbr.rel (%p254) target = $region40
      $region39: #{tpu_custom_call.1} parent=5 // pred_region
        %s257 = ssub.s32 %s14, 2
        // Predicated region
        $region41: #{tpu_custom_call.1} parent=39 // pred_check
          %p258 = pneg %p90
        $region42: #{tpu_custom_call.1} parent=39 // pred_check_branch
          %260 = sbr.rel (%p258) target = $region44
        $region43: #{tpu_custom_call.1} parent=39 // pred_region
          %s261 = sand.u32 %s75, 1
          %s262 = scalar_lea.sflag [#allocation4], %s261
          %s263 = sand.u32 %s75, 1
          %s264 = smul.addr %s263, 8
          %s265 = scalar_lea.vmem [#allocation5], %s264
          %267 = dma.done %s262, 128
        $region44: #{tpu_custom_call.1} parent=39 // pred_fallthru
          _
      $region40: #{tpu_custom_call.1} parent=5 // pred_fallthru
        _
    $region6: #{tpu_custom_call.1} parent=1 // loop_footer
      %s18 = sadd.s32 1, %s14
    $region7: #{tpu_custom_call.1} parent=1 // loop_footer_branch
      %13 = sbr.rel target = $region3
    $region8: #{tpu_custom_call.1} parent=1 // loop_exit
      _
    %268 = vsyncpa [#allocation3], 1
    %s269 = scalar_lea.sflag [#allocation3], 1
    %270 = vsyncpa %s269, 1
    %271 = vsyncpa [#allocation4], 1
    %s272 = scalar_lea.sflag [#allocation4], 1
    %273 = vsyncpa %s272, 1

</llo_original>
